<compile_context>
chip_gen: v7x
topology: tpu7x:2x2x1
jax: 0.10.0
libtpu: 0.0.40
codegen_flags: <defaults>
</compile_context>

<pallas_src>
import math
import jax
import jax.numpy as jnp
from jax.experimental import pallas as pl
from jax.experimental.pallas import tpu as pltpu


# --------------------------------------------------------------------------- kernels

def _ffn_resident_kernel(x_ref, w1_ref, b1_ref, w2_ref, b2_ref, o_ref):
    """Whole filter dimension in one shot; weights resident across the M grid."""
    h = jnp.dot(x_ref[...], w1_ref[...], preferred_element_type=jnp.float32)
    h = jnp.maximum(h + b1_ref[...], 0.0)
    # TODO(synk): nn.Dropout is identity in eval mode; training-mode mask/scale not implemented.
    y = jnp.dot(h.astype(w2_ref.dtype), w2_ref[...], preferred_element_type=jnp.float32)
    o_ref[...] = (y + b2_ref[...]).astype(o_ref.dtype)


def _ffn_tiled_kernel_accout(x_ref, w1_ref, b1_ref, w2_ref, b2_ref, o_ref):
    """F tiled; f32 output block (index constant over k) doubles as the accumulator."""
    k = pl.program_id(1)

    @pl.when(k == 0)
    def _init():
        o_ref[...] = jnp.zeros_like(o_ref)

    h = jnp.dot(x_ref[...], w1_ref[...], preferred_element_type=jnp.float32)
    h = jnp.maximum(h + b1_ref[...], 0.0)
    o_ref[...] += jnp.dot(h.astype(w2_ref.dtype), w2_ref[...],
                          preferred_element_type=jnp.float32)

    @pl.when(k == pl.num_programs(1) - 1)
    def _finalize():
        o_ref[...] += b2_ref[...]


def _ffn_tiled_kernel_scratch(x_ref, w1_ref, b1_ref, w2_ref, b2_ref, o_ref, acc_ref):
    """F tiled; narrow output dtype, so accumulate in an f32 VMEM scratch."""
    k = pl.program_id(1)

    @pl.when(k == 0)
    def _init():
        acc_ref[...] = jnp.zeros_like(acc_ref)

    h = jnp.dot(x_ref[...], w1_ref[...], preferred_element_type=jnp.float32)
    h = jnp.maximum(h + b1_ref[...], 0.0)
    acc_ref[...] += jnp.dot(h.astype(w2_ref.dtype), w2_ref[...],
                            preferred_element_type=jnp.float32)

    @pl.when(k == pl.num_programs(1) - 1)
    def _finalize():
        o_ref[...] = (acc_ref[...] + b2_ref[...]).astype(o_ref.dtype)


# --------------------------------------------------------------------------- planning

def _cdiv(a, b):
    return -(-a // b)


def _round_up(x, m):
    return ((x + m - 1) // m) * m


def _plan_tiles(M, hidden, F, x_dtype, w_dtype, out_dtype, force_tf=None):
    xs = jnp.dtype(x_dtype).itemsize
    ws = jnp.dtype(w_dtype).itemsize
    osz = jnp.dtype(out_dtype).itemsize
    pack = max(8, 32 // max(xs, 1))          # sublane pack: 8 (f32), 16 (bf16), 32 (int8/fp8)

    # Generation-aware VMEM capacity; fall back to the smallest (v7x 64 MiB per TC).
    try:
        cap = int(pltpu.get_tpu_info().vmem_capacity_bytes)
    except Exception:
        cap = 64 * 1024 * 1024
    budget = (cap * 3) // 4                  # tile budget, headroom under the scoped limit
    vmem_limit = int(min((cap * 9) // 10, cap - (4 << 20)))

    def clamp_tm(tm):
        tm = max(pack, min(tm, _round_up(M, pack)))
        # Keep at least 2 row tiles when M allows, so both v7x TensorCores get work.
        if M > pack and _cdiv(M, tm) < 2:
            tm = max(pack, _round_up(_cdiv(M, 2), pack))
        return tm

    # ---- resident-weights path: weights DMA'd from HBM exactly once -------------------
    weight_bytes = 2 * (2 * hidden * F * ws) + 2 * (F + hidden) * 4   # double-buffered + biases
    want_resident = (force_tf is None and weight_bytes <= (budget * 3) // 5) or \
                    (force_tf is not None and force_tf >= F)
    if want_resident:
        per_row = 2 * hidden * (xs + osz)     # double-buffered x tile + out tile, per row
        tm = 1024
        while tm > pack and weight_bytes + per_row * tm > budget:
            tm //= 2
        return dict(tm=clamp_tm(tm), tf=F, vmem_limit=vmem_limit)

    # ---- tiled-F path: grow TM first (cuts weight re-streaming), then TF --------------
    if force_tf is not None:
        tf_cands = [force_tf]
    else:
        tf_cands = [c for c in (4096, 2048, 1024, 512, 256, 128) if F % c == 0] or [F]
    need_scratch = jnp.dtype(out_dtype) != jnp.dtype(jnp.float32)

    choice = None
    for tm in (1024, 512, 256, 128, 64, 32, 16, 8):
        if tm < pack:
            break
        for tf in tf_cands:
            foot = (2 * tm * hidden * xs               # x tile (double-buffered)
                    + 2 * tm * hidden * osz            # out tile
                    + 2 * (2 * hidden * tf * ws)       # W1 + W2 slabs
                    + (tm * hidden * 4 if need_scratch else 0)
                    + 2 * (tf + hidden) * 4)           # bias slabs
            if foot <= budget:
                choice = (tm, tf)
                break
        if choice is not None:
            break
    if choice is None:
        choice = (pack, min(tf_cands))
    tm, tf = choice
    return dict(tm=clamp_tm(tm), tf=tf, vmem_limit=vmem_limit)


# --------------------------------------------------------------------------- wrapper

def feed_forward_network(x, w1, b1, w2, b2, *, compute_dtype=None, force_tf=None):
    """x: (..., hidden). w1: (hidden, F) pre-transposed, b1: (F,), w2: (F, hidden), b2: (hidden,).

    compute_dtype: optional MXU operand dtype (e.g. jnp.bfloat16); output keeps x.dtype.
    force_tf: testing hook to force a particular filter-dimension tile size.
    """
    orig_shape = x.shape
    hidden = orig_shape[-1]
    F = w1.shape[1]
    out_dtype = x.dtype

    if compute_dtype is not None:
        x = x.astype(compute_dtype)
        w1 = w1.astype(compute_dtype)
        w2 = w2.astype(compute_dtype)

    x2d = x.reshape(-1, hidden)
    M = x2d.shape[0]

    plan = _plan_tiles(M, hidden, F, x2d.dtype, w1.dtype, out_dtype, force_tf)
    TM, TF, vmem_limit = plan["tm"], plan["tf"], plan["vmem_limit"]

    # Biases kept in f32: they are added to f32 accumulations.
    b1_2d = b1.astype(jnp.float32).reshape(1, F)
    b2_2d = b2.astype(jnp.float32).reshape(1, hidden)

    m_tiles = _cdiv(M, TM)
    tiled_f = TF < F
    weight_reads = m_tiles if tiled_f else 1

    x_is = jnp.dtype(x2d.dtype).itemsize
    w_is = jnp.dtype(w1.dtype).itemsize
    o_is = jnp.dtype(out_dtype).itemsize
    cost = pl.CostEstimate(
        flops=4 * M * hidden * F,                       # two matmuls, 2*M*K*N each
        transcendentals=0,
        bytes_accessed=(x_is * M * hidden               # x read
                        + o_is * M * hidden             # out write
                        + weight_reads * (2 * hidden * F * w_is + 4 * (F + hidden))),
    )

    if not tiled_f:
        grid = (m_tiles,)
        in_specs = [
            pl.BlockSpec((TM, hidden), lambda i: (i, 0)),   # x row tile
            pl.BlockSpec((hidden, F),  lambda i: (0, 0)),   # W1 (resident)
            pl.BlockSpec((1, F),       lambda i: (0, 0)),   # b1 (resident)
            pl.BlockSpec((F, hidden),  lambda i: (0, 0)),   # W2 (resident)
            pl.BlockSpec((1, hidden),  lambda i: (0, 0)),   # b2 (resident)
        ]
        out_specs = pl.BlockSpec((TM, hidden), lambda i: (i, 0))
        kernel = _ffn_resident_kernel
        scratch = []
        semantics = ("parallel",)
    else:
        grid = (m_tiles, F // TF)
        in_specs = [
            pl.BlockSpec((TM, hidden), lambda i, k: (i, 0)),   # x row tile (reused across k)
            pl.BlockSpec((hidden, TF), lambda i, k: (0, k)),   # W1 column slab
            pl.BlockSpec((1, TF),      lambda i, k: (0, k)),   # b1 slab
            pl.BlockSpec((TF, hidden), lambda i, k: (k, 0)),   # W2 row slab
            pl.BlockSpec((1, hidden),  lambda i, k: (0, 0)),   # b2 (resident)
        ]
        out_specs = pl.BlockSpec((TM, hidden), lambda i, k: (i, 0))
        if jnp.dtype(out_dtype) == jnp.dtype(jnp.float32):
            kernel = _ffn_tiled_kernel_accout
            scratch = []
        else:
            kernel = _ffn_tiled_kernel_scratch
            scratch = [pltpu.VMEM((TM, hidden), jnp.float32)]
        semantics = ("parallel", "arbitrary")

    out = pl.pallas_call(
        kernel,
        out_shape=jax.ShapeDtypeStruct((M, hidden), out_dtype),
        grid_spec=pltpu.PrefetchScalarGridSpec(
            num_scalar_prefetch=0,
            grid=grid,
            in_specs=in_specs,
            out_specs=out_specs,
            scratch_shapes=scratch,
        ),
        compiler_params=pltpu.CompilerParams(
            dimension_semantics=semantics,
            vmem_limit_bytes=vmem_limit,
        ),
        cost_estimate=cost,
    )(x2d, w1, b1_2d, w2, b2_2d)

    return out.reshape(orig_shape)


# --------------------------------------------------------------------------- demo / self-test

def xavier_uniform(key, fan_in, fan_out, dtype=jnp.float32):
    # Matches torch.nn.init.xavier_uniform_ bound for a Linear weight of shape (out, in).
    bound = math.sqrt(6.0 / (fan_in + fan_out))
    return jax.random.uniform(key, (fan_in, fan_out), dtype=jnp.float32,
                              minval=-bound, maxval=bound).astype(dtype)


def _make_params(key, hidden, filt, dtype=jnp.float32):
    k1, k2 = jax.random.split(key)
    w1 = xavier_uniform(k1, hidden, filt, dtype)          # layer1 weight, pre-transposed
    b1 = jnp.zeros((filt,), dtype=dtype)                  # init.constant_(bias, 0)
    w2 = xavier_uniform(k2, filt, hidden, dtype)          # layer2 weight, pre-transposed
    b2 = jnp.zeros((hidden,), dtype=dtype)
    return w1, b1, w2, b2


def _ref_ffn(x, w1, b1, w2, b2):
    xf = x.astype(jnp.float32)
    h = jnp.maximum(xf @ w1.astype(jnp.float32) + b1.astype(jnp.float32), 0.0)
    return h @ w2.astype(jnp.float32) + b2.astype(jnp.float32)


if __name__ == "__main__":
    key = jax.random.PRNGKey(0)
    kx1, kp1, kx2, kp2, kx3, kp3 = jax.random.split(key, 6)

    # Test 1: small f32, resident-weights path, ragged M (partial last output block).
    x1 = jax.random.normal(kx1, (2, 9, 32), dtype=jnp.float32)
    p1 = _make_params(kp1, 32, 64)
    out1 = feed_forward_network(x1, *p1)
    jax.block_until_ready(out1)
    ref1 = _ref_ffn(x1, *p1)
    assert out1.shape == x1.shape
    assert jnp.allclose(out1.astype(jnp.float32), ref1, atol=1e-5, rtol=1e-5)

    # Test 2: f32, forced tiled-F path (accumulates directly into the f32 output block).
    x2 = jax.random.normal(kx2, (2, 8, 128), dtype=jnp.float32)
    p2 = _make_params(kp2, 128, 512)
    out2 = feed_forward_network(x2, *p2, force_tf=128)
    jax.block_until_ready(out2)
    ref2 = _ref_ffn(x2, *p2)
    assert out2.shape == x2.shape
    assert jnp.allclose(out2.astype(jnp.float32), ref2, atol=1e-4, rtol=1e-4)

    # Test 3: bf16 activations + weights, forced tiled-F path (f32 scratch accumulator).
    x3 = jax.random.normal(kx3, (2, 8, 128), dtype=jnp.float32).astype(jnp.bfloat16)
    p3 = _make_params(kp3, 128, 256, dtype=jnp.bfloat16)
    out3 = feed_forward_network(x3, *p3, force_tf=128)
    jax.block_until_ready(out3)
    ref3 = _ref_ffn(x3, *p3)
    assert out3.shape == x3.shape
    assert out3.dtype == jnp.bfloat16
    assert jnp.allclose(out3.astype(jnp.float32), ref3, atol=5e-2, rtol=5e-2)

    print("KERNEL_OK")
</pallas_src>

<mosaic_0001>
module attributes {stable_mosaic.version = 11 : i64} {
  func.func @_ffn_resident_kernel(%arg0: i32, %arg1: memref<16x32xf32, #tpu.memory_space<vmem>>, %arg2: memref<32x64xf32, #tpu.memory_space<vmem>>, %arg3: memref<1x64xf32, #tpu.memory_space<vmem>>, %arg4: memref<64x32xf32, #tpu.memory_space<vmem>>, %arg5: memref<1x32xf32, #tpu.memory_space<vmem>>, %arg6: memref<16x32xf32, #tpu.memory_space<vmem>>) attributes {dimension_semantics = [#tpu.dimension_semantics<parallel>], iteration_bounds = array<i64: 2>, scalar_prefetch = 0 : i64, scratch_operands = 0 : i64, tpu.core_type = #tpu.core_type<tc>, window_params = [{transform_indices = @transform_0, window_bounds = array<i64: 16, 32>}, {pipeline_mode = #tpu.pipeline_mode<synchronous>, transform_indices = @transform_1, window_bounds = array<i64: 32, 64>}, {pipeline_mode = #tpu.pipeline_mode<synchronous>, transform_indices = @transform_2, window_bounds = array<i64: 1, 64>}, {pipeline_mode = #tpu.pipeline_mode<synchronous>, transform_indices = @transform_3, window_bounds = array<i64: 64, 32>}, {pipeline_mode = #tpu.pipeline_mode<synchronous>, transform_indices = @transform_4, window_bounds = array<i64: 1, 32>}, {transform_indices = @transform_5, window_bounds = array<i64: 16, 32>}]} {
    %c0 = arith.constant 0 : index
    %c0_0 = arith.constant 0 : index
    %0 = vector.load %arg1[%c0, %c0_0] : memref<16x32xf32, #tpu.memory_space<vmem>>, vector<16x32xf32>
    %c0_1 = arith.constant 0 : index
    %c0_2 = arith.constant 0 : index
    %1 = vector.load %arg2[%c0_1, %c0_2] : memref<32x64xf32, #tpu.memory_space<vmem>>, vector<32x64xf32>
    %cst = arith.constant dense<0.000000e+00> : vector<16x64xf32>
    %2 = tpu.matmul %0, %1, %cst {dimension_numbers = #tpu.dot_dimension_numbers<[1], [0], [0], [1], [0, 0, 1, 1], [], []>} : vector<16x32xf32>, vector<32x64xf32>, vector<16x64xf32> -> vector<16x64xf32>
    %c0_3 = arith.constant 0 : index
    %c0_4 = arith.constant 0 : index
    %3 = vector.load %arg3[%c0_3, %c0_4] : memref<1x64xf32, #tpu.memory_space<vmem>>, vector<1x64xf32>
    %4 = vector.broadcast %3 : vector<1x64xf32> to vector<16x64xf32>
    %5 = arith.addf %2, %4 : vector<16x64xf32>
    %cst_5 = arith.constant 0.000000e+00 : f32
    %6 = vector.broadcast %cst_5 : f32 to vector<16x64xf32>
    %7 = arith.maximumf %5, %6 : vector<16x64xf32>
    %c0_6 = arith.constant 0 : index
    %c0_7 = arith.constant 0 : index
    %8 = vector.load %arg4[%c0_6, %c0_7] : memref<64x32xf32, #tpu.memory_space<vmem>>, vector<64x32xf32>
    %cst_8 = arith.constant dense<0.000000e+00> : vector<16x32xf32>
    %9 = tpu.matmul %7, %8, %cst_8 {dimension_numbers = #tpu.dot_dimension_numbers<[1], [0], [0], [1], [0, 0, 1, 1], [], []>} : vector<16x64xf32>, vector<64x32xf32>, vector<16x32xf32> -> vector<16x32xf32>
    %c0_9 = arith.constant 0 : index
    %c0_10 = arith.constant 0 : index
    %10 = vector.load %arg5[%c0_9, %c0_10] : memref<1x32xf32, #tpu.memory_space<vmem>>, vector<1x32xf32>
    %11 = vector.broadcast %10 : vector<1x32xf32> to vector<16x32xf32>
    %12 = arith.addf %9, %11 : vector<16x32xf32>
    %c0_11 = arith.constant 0 : index
    %c0_12 = arith.constant 0 : index
    %13 = vector.load %arg6[%c0_11, %c0_12] : memref<16x32xf32, #tpu.memory_space<vmem>>, vector<16x32xf32>
    tpu.vector_store %arg6[%c0_11, %c0_12], %12 {strides = array<i32>} : memref<16x32xf32, #tpu.memory_space<vmem>>, vector<16x32xf32>,
    return
  }
  func.func @transform_0(%arg0: i32) -> (i32, i32) {
    %c0_i32 = arith.constant 0 : i32
    %c0_i32_0 = arith.constant 0 : i32
    return %arg0, %c0_i32 : i32, i32
  }
  func.func @transform_1(%arg0: i32) -> (i32, i32) {
    %c0_i32 = arith.constant 0 : i32
    %c0_i32_0 = arith.constant 0 : i32
    %c0_i32_1 = arith.constant 0 : i32
    return %c0_i32, %c0_i32_0 : i32, i32
  }
  func.func @transform_2(%arg0: i32) -> (i32, i32) {
    %c0_i32 = arith.constant 0 : i32
    %c0_i32_0 = arith.constant 0 : i32
    %c0_i32_1 = arith.constant 0 : i32
    return %c0_i32, %c0_i32_0 : i32, i32
  }
  func.func @transform_3(%arg0: i32) -> (i32, i32) {
    %c0_i32 = arith.constant 0 : i32
    %c0_i32_0 = arith.constant 0 : i32
    %c0_i32_1 = arith.constant 0 : i32
    return %c0_i32, %c0_i32_0 : i32, i32
  }
  func.func @transform_4(%arg0: i32) -> (i32, i32) {
    %c0_i32 = arith.constant 0 : i32
    %c0_i32_0 = arith.constant 0 : i32
    %c0_i32_1 = arith.constant 0 : i32
    return %c0_i32, %c0_i32_0 : i32, i32
  }
  func.func @transform_5(%arg0: i32) -> (i32, i32) {
    %c0_i32 = arith.constant 0 : i32
    %c0_i32_0 = arith.constant 0 : i32
    return %arg0, %c0_i32 : i32, i32
  }
}

</mosaic_0001>

<llo_original>
// kernel: tpu_custom_call.1
$region0: #{tpu_custom_call.1}
  #allocation0 [shape = 'u32[]', space=smem, size = 0x4, offset = 0x4, fixed_abs, tag = 'smem constant byte address 0x4 - core index']
  #allocation1 [shape = 'u32[144,128]{1,0:T(1,128)}', space=vmem, size = 0x12000, scoped, tag = 'internal scratch']
  %s0 = inlined_call_operand.vmem [shape: f32[18,32], index: 0, kind: input, shape index: {}]
  %s1 = inlined_call_operand.vmem [shape: f32[32,64], index: 1, kind: input, shape index: {}]
  %s2 = inlined_call_operand.vmem [shape: f32[1,64], index: 2, kind: input, shape index: {}]
  %s3 = inlined_call_operand.vmem [shape: f32[64,32], index: 3, kind: input, shape index: {}]
  %s4 = inlined_call_operand.vmem [shape: f32[1,32], index: 4, kind: input, shape index: {}]
  %s5 = inlined_call_operand.hbm [shape: f32[18,32], index: 5, kind: output, shape index: {}]
  %s6 = sld [smem:[#allocation0]]
  $region53: #{tpu_custom_call.1} parent=0
    _
  %s8 = ssub.s32 1, %s6
  %s9 = scalar_select 0, %s8, %s6
  $region1: #{tpu_custom_call.1} parent=0
    #allocation2 [shape = 'u8[16384]{0}', space=vmem, size = 0x4000, scoped, tag = 'output window, operand 0']
    #allocation3 [shape = 's32[2]{0}', space=sflag, size = 0x8, scoped, tag = 'scoped memory for tpu_custom_call.1']
    %10 = vsyncpa [#allocation3], 0
    %s11 = scalar_lea.sflag [#allocation3], 1
    %12 = vsyncpa %s11, 0
    loop: start=0, step=1, limit=4
    $region2: #{tpu_custom_call.1} parent=1 // loop_pre_header
      _
    $region3: #{tpu_custom_call.1} parent=1 // loop_header
      %s14 = sphi 0, %s18
      %p15 = scmp.ge.s32.totalorder %s14, 4
      %s24 = sphi 0, %s26
      %s27 = sphi 0, %s24
      %s28 = sphi 0, %s27
      %s44 = sphi 0, %s28
      %s48 = sphi 0, %s48
      %s50 = sphi 0, %s48
      %s51 = sphi 0, %s50
      %s65 = sphi 0, %s51
      %s69 = sphi 0, %s69
      %s71 = sphi 0, %s69
      %s72 = sphi 0, %s71
      %s86 = sphi 0, %s72
      %s90 = sphi 0, %s90
      %s92 = sphi 0, %s90
      %s93 = sphi 0, %s92
      %s107 = sphi 0, %s93
      %s111 = sphi 0, %s111
      %s113 = sphi 0, %s111
      %s114 = sphi 0, %s113
      %s128 = sphi 0, %s114
      %s134 = sphi 0, %s136
      %s137 = sphi 0, %s134
      %s138 = sphi 0, %s137
      %s154 = sphi 0, %s138
    $region4: #{tpu_custom_call.1} parent=1 // loop_header_branch
      %17 = sbr.rel (%p15) target = $region8
    $region5: #{tpu_custom_call.1} parent=1 // loop_body
      %s19 = ssub.s32 %s14, 1
      %s20 = ssub.s32 %s14, 2
      %s21 = sadd.s32 %s14, 1
      %s22 = ssub.s32 %s14, %s21
      %p23 = scmp.eq.s32.totalorder %s22, 0
      %s25 = sadd.s32 %s24, 1
      %s26 = scalar_select %p23, %s24, %s25
      %p29 = pneg %p23
      %p30 = scmp.eq.s32.totalorder %s14, 1
      %p31 = por %p29, %p30
      %p32 = scmp.ne.s32.totalorder %s24, %s27
      %p33 = scmp.eq.s32.totalorder %s14, 0
      %p34 = por %p32, %p33
      %p35 = scmp.ne.s32.totalorder %s24, %s27
      %p36 = scmp.eq.s32.totalorder %s19, 1
      %p37 = por %p35, %p36
      %p38 = scmp.ne.s32.totalorder %s27, %s28
      %p39 = scmp.eq.s32.totalorder %s19, 0
      %p40 = por %p38, %p39
      %p41 = scmp.ne.s32.totalorder %s27, %s28
      %p42 = scmp.eq.s32.totalorder %s20, 1
      %p43 = por %p41, %p42
      %p45 = scmp.ne.s32.totalorder %s28, %s44
      %p46 = scmp.eq.s32.totalorder %s20, 0
      %p47 = por %p45, %p46
      %s49 = sadd.s32 %s48, 1
      %p52 = scmp.eq.s32.totalorder %s14, 1
      %p53 = scmp.ne.s32.totalorder %s48, %s50
      %p54 = scmp.eq.s32.totalorder %s14, 0
      %p55 = por %p53, %p54
      %p56 = scmp.ne.s32.totalorder %s48, %s50
      %p57 = scmp.eq.s32.totalorder %s19, 1
      %p58 = por %p56, %p57
      %p59 = scmp.ne.s32.totalorder %s50, %s51
      %p60 = scmp.eq.s32.totalorder %s19, 0
      %p61 = por %p59, %p60
      %p62 = scmp.ne.s32.totalorder %s50, %s51
      %p63 = scmp.eq.s32.totalorder %s20, 1
      %p64 = por %p62, %p63
      %p66 = scmp.ne.s32.totalorder %s51, %s65
      %p67 = scmp.eq.s32.totalorder %s20, 0
      %p68 = por %p66, %p67
      %s70 = sadd.s32 %s69, 1
      %p73 = scmp.eq.s32.totalorder %s14, 1
      %p74 = scmp.ne.s32.totalorder %s69, %s71
      %p75 = scmp.eq.s32.totalorder %s14, 0
      %p76 = por %p74, %p75
      %p77 = scmp.ne.s32.totalorder %s69, %s71
      %p78 = scmp.eq.s32.totalorder %s19, 1
      %p79 = por %p77, %p78
      %p80 = scmp.ne.s32.totalorder %s71, %s72
      %p81 = scmp.eq.s32.totalorder %s19, 0
      %p82 = por %p80, %p81
      %p83 = scmp.ne.s32.totalorder %s71, %s72
      %p84 = scmp.eq.s32.totalorder %s20, 1
      %p85 = por %p83, %p84
      %p87 = scmp.ne.s32.totalorder %s72, %s86
      %p88 = scmp.eq.s32.totalorder %s20, 0
      %p89 = por %p87, %p88
      %s91 = sadd.s32 %s90, 1
      %p94 = scmp.eq.s32.totalorder %s14, 1
      %p95 = scmp.ne.s32.totalorder %s90, %s92
      %p96 = scmp.eq.s32.totalorder %s14, 0
      %p97 = por %p95, %p96
      %p98 = scmp.ne.s32.totalorder %s90, %s92
      %p99 = scmp.eq.s32.totalorder %s19, 1
      %p100 = por %p98, %p99
      %p101 = scmp.ne.s32.totalorder %s92, %s93
      %p102 = scmp.eq.s32.totalorder %s19, 0
      %p103 = por %p101, %p102
      %p104 = scmp.ne.s32.totalorder %s92, %s93
      %p105 = scmp.eq.s32.totalorder %s20, 1
      %p106 = por %p104, %p105
      %p108 = scmp.ne.s32.totalorder %s93, %s107
      %p109 = scmp.eq.s32.totalorder %s20, 0
      %p110 = por %p108, %p109
      %s112 = sadd.s32 %s111, 1
      %p115 = scmp.eq.s32.totalorder %s14, 1
      %p116 = scmp.ne.s32.totalorder %s111, %s113
      %p117 = scmp.eq.s32.totalorder %s14, 0
      %p118 = por %p116, %p117
      %p119 = scmp.ne.s32.totalorder %s111, %s113
      %p120 = scmp.eq.s32.totalorder %s19, 1
      %p121 = por %p119, %p120
      %p122 = scmp.ne.s32.totalorder %s113, %s114
      %p123 = scmp.eq.s32.totalorder %s19, 0
      %p124 = por %p122, %p123
      %p125 = scmp.ne.s32.totalorder %s113, %s114
      %p126 = scmp.eq.s32.totalorder %s20, 1
      %p127 = por %p125, %p126
      %p129 = scmp.ne.s32.totalorder %s114, %s128
      %p130 = scmp.eq.s32.totalorder %s20, 0
      %p131 = por %p129, %p130
      %s132 = ssub.s32 %s14, %s21
      %p133 = scmp.eq.s32.totalorder %s132, 0
      %s135 = sadd.s32 %s134, 1
      %s136 = scalar_select %p133, %s134, %s135
      %p139 = pneg %p133
      %p140 = scmp.eq.s32.totalorder %s14, 1
      %p141 = por %p139, %p140
      %p142 = scmp.ne.s32.totalorder %s134, %s137
      %p143 = scmp.eq.s32.totalorder %s14, 0
      %p144 = por %p142, %p143
      %p145 = scmp.ne.s32.totalorder %s134, %s137
      %p146 = scmp.eq.s32.totalorder %s19, 1
      %p147 = por %p145, %p146
      %p148 = scmp.ne.s32.totalorder %s137, %s138
      %p149 = scmp.eq.s32.totalorder %s19, 0
      %p150 = por %p148, %p149
      %p151 = scmp.ne.s32.totalorder %s137, %s138
      %p152 = scmp.eq.s32.totalorder %s20, 1
      %p153 = por %p151, %p152
      %p155 = scmp.ne.s32.totalorder %s138, %s154
      %p156 = scmp.eq.s32.totalorder %s20, 0
      %p157 = por %p155, %p156
      %p158 = scmp.le.s32.totalorder 1, %s14
      %p159 = scmp.lt.s32.totalorder %s14, 3
      %p160 = pnand %p158, %p159
      %p161 = pneg %p160
      // Predicated region
      $region9: #{tpu_custom_call.1} parent=5 // pred_check
        _
      $region10: #{tpu_custom_call.1} parent=5 // pred_check_branch
        %163 = sbr.rel (%p160) target = $region12
      $region11: #{tpu_custom_call.1} parent=5 // pred_region
        %s164 = ssub.s32 %s14, 1
        // Predicated region
        $region13: #{tpu_custom_call.1} parent=11 // pred_check
          %p165 = pneg %p61
        $region14: #{tpu_custom_call.1} parent=11 // pred_check_branch
          %167 = sbr.rel (%p165) target = $region16
        $region15: #{tpu_custom_call.1} parent=11 // pred_region
          _
        $region16: #{tpu_custom_call.1} parent=11 // pred_fallthru
          _
        // Predicated region
        $region17: #{tpu_custom_call.1} parent=11 // pred_check
          %p168 = pneg %p82
        $region18: #{tpu_custom_call.1} parent=11 // pred_check_branch
          %170 = sbr.rel (%p168) target = $region20
        $region19: #{tpu_custom_call.1} parent=11 // pred_region
          _
        $region20: #{tpu_custom_call.1} parent=11 // pred_fallthru
          _
        // Predicated region
        $region21: #{tpu_custom_call.1} parent=11 // pred_check
          %p171 = pneg %p103
        $region22: #{tpu_custom_call.1} parent=11 // pred_check_branch
          %173 = sbr.rel (%p171) target = $region24
        $region23: #{tpu_custom_call.1} parent=11 // pred_region
          _
        $region24: #{tpu_custom_call.1} parent=11 // pred_fallthru
          _
        // Predicated region
        $region25: #{tpu_custom_call.1} parent=11 // pred_check
          %p174 = pneg %p124
        $region26: #{tpu_custom_call.1} parent=11 // pred_check_branch
          %176 = sbr.rel (%p174) target = $region28
        $region27: #{tpu_custom_call.1} parent=11 // pred_region
          _
        $region28: #{tpu_custom_call.1} parent=11 // pred_fallthru
          _
      $region12: #{tpu_custom_call.1} parent=5 // pred_fallthru
        _
      %p177 = scmp.lt.s32.totalorder %s14, 2
      // Predicated region
      $region29: #{tpu_custom_call.1} parent=5 // pred_check
        %p178 = pneg %p177
      $region30: #{tpu_custom_call.1} parent=5 // pred_check_branch
        %180 = sbr.rel (%p178) target = $region32
      $region31: #{tpu_custom_call.1} parent=5 // pred_region
        // Predicated region
        $region33: #{tpu_custom_call.1} parent=31 // pred_check
          %p181 = pneg %p34
        $region34: #{tpu_custom_call.1} parent=31 // pred_check_branch
          %183 = sbr.rel (%p181) target = $region36
        $region35: #{tpu_custom_call.1} parent=31 // pred_region
          %s184 = smul.u32 2, %s14
          %s185 = ssub.s32 3, %s184
          %p186 = scmp.lt.s32.totalorder %s185, 2
          %s187 = scalar_select %p186, %s185, 2
          %s188 = smul.u32 128, %s187
          %p189 = scmp.lt.s32.totalorder %s184, 2
          %s190 = scalar_select %p189, %s184, 2
          %s191 = smul.addr %s190, 8
          %s192 = scalar_lea.vmem %s0, %s191
          %s193 = smul.u32 2, %s14
          %s194 = ssub.s32 3, %s193
          %p195 = scmp.lt.s32.totalorder %s194, 2
          %s196 = scalar_select %p195, %s194, 2
          %s197 = smul.u32 128, %s196
        $region36: #{tpu_custom_call.1} parent=31 // pred_fallthru
          _
      $region32: #{tpu_custom_call.1} parent=5 // pred_fallthru
        _
      %p198 = scmp.le.s32.totalorder 1, %s14
      %p199 = scmp.lt.s32.totalorder %s14, 3
      %p200 = pnand %p198, %p199
      %p201 = pneg %p200
      // Predicated region
      $region37: #{tpu_custom_call.1} parent=5 // pred_check
        _
      $region38: #{tpu_custom_call.1} parent=5 // pred_check_branch
        %203 = sbr.rel (%p200) target = $region40
      $region39: #{tpu_custom_call.1} parent=5 // pred_region
        %s204 = ssub.s32 %s14, 1
        %s205 = smul.u32 2, %s19
        %s206 = ssub.s32 3, %s205
        %p207 = scmp.lt.s32.totalorder %s206, 2
        %s208 = scalar_select %p207, %s206, 2
        %s209 = smul.u32 128, %s208
        %p210 = scmp.lt.s32.totalorder %s205, 2
        %s211 = scalar_select %p210, %s205, 2
        %s212 = smul.addr %s211, 8
        %s213 = scalar_lea.vmem %s0, %s212
        %p214 = pneg %p40
        %p215 = pneg %p37
        %p216 = pneg %p61
        %p217 = pneg %p58
        %p218 = pneg %p82
        %p219 = pneg %p79
        %p220 = pneg %p103
        %p221 = pneg %p100
        %p222 = pneg %p124
        %p223 = pneg %p121
        %p224 = pneg %p150
        %p225 = pneg %p147
        %s226 = sand.u32 %s137, 1
        %s227 = scalar_lea.sflag [#allocation3], %s226
        %s228 = sand.u32 %s137, 1
        %s229 = smul.addr %s228, 16
        %s230 = scalar_lea.vmem [#allocation2], %s229
        %s231 = smul.u32 2, %s19
        %s232 = ssub.s32 3, %s231
        %p233 = scmp.lt.s32.totalorder %s232, 2
        %s234 = scalar_select %p233, %s232, 2
        %s235 = smul.u32 128, %s234
        %p236 = scmp.lt.s32.totalorder %s231, 2
        %s237 = scalar_select %p236, %s231, 2
        %s238 = smul.addr %s237, 8
        %s239 = scalar_lea.vmem %s0, %s238
        %s240 = smul.u32 2, %s19
        %s241 = ssub.s32 3, %s240
        %p242 = scmp.lt.s32.totalorder %s241, 2
        %s243 = scalar_select %p242, %s241, 2
        %s244 = smul.u32 128, %s243
        %s245 = smul.u32 2, %s19
        %s246 = ssub.s32 3, %s245
        %p247 = scmp.lt.s32.totalorder %s246, 2
        %s248 = scalar_select %p247, %s246, 2
        %s249 = smul.u32 128, %s248
        %v250 = vld [vmem:[%s239] sm:$0xff]
        %v251 = vld [vmem:[%s239 + $0x8] sm:$0xff]
        %v252 = vld [vmem:[%s1] sm:$0xff]
        %v253 = vld [vmem:[%s1 + $0x8] sm:$0xff]
        %v254 = vld [vmem:[%s1 + $0x10] sm:$0xff]
        %v255 = vld [vmem:[%s1 + $0x18] sm:$0xff]
        %v256 = vld [vmem:[%s2] sm:$0x1]
        %v258 = vlaneseq
        %v259 = vshrl.u32 %v258, 7
        %v260 = vsub.s32 0, %v259
        %v261 = vrot.slane %v256, %v260
        %vm263 = vcmask 261120
        %v265 = vsel %vm263, %v250, 0
        %v268 = vsel %vm263, %v251, 0
        %270 = vmatprep.subr.mxu0 0.0
        %271 = vmatpush1.msra.mxu0 %v252
        %272 = vmatprep.subr.mxu0 0.0
        %273 = vmatpush1.msra.mxu0 %v253
        %274 = vmatprep.subr.mxu0 0.0
        %275 = vmatpush1.msra.mxu0 %v254
        %276 = vmatprep.subr.mxu0 0.0
        %277 = vmatpush1.msra.mxu0 %v255
        %278 = vmatprep.subr.mxu0 0.0
        %279 = vmatpush1.msra.mxu0 0.0
        %280 = vmatprep.subr.mxu0 0.0
        %281 = vmatpush1.msra.mxu0 0.0
        %282 = vmatprep.subr.mxu0 0.0
        %283 = vmatpush1.msra.mxu0 0.0
        %284 = vmatprep.subr.mxu0 0.0
        %285 = vmatpush1.msra.mxu0 0.0
        %286 = vmatprep.subr.mxu0 0.0
        %287 = vmatpush1.msra.mxu0 0.0
        %288 = vmatprep.subr.mxu0 0.0
        %289 = vmatpush1.msra.mxu0 0.0
        %290 = vmatprep.subr.mxu0 0.0
        %291 = vmatpush1.msra.mxu0 0.0
        %292 = vmatprep.subr.mxu0 0.0
        %293 = vmatpush1.msra.mxu0 0.0
        %294 = vmatprep.subr.mxu0 0.0
        %295 = vmatpush1.msra.mxu0 0.0
        %296 = vmatprep.subr.mxu0 0.0
        %297 = vmatpush1.msra.mxu0 0.0
        %298 = vmatprep.subr.mxu0 0.0
        %299 = vmatpush1.msra.mxu0 0.0
        %300 = vmatprep.subr.mxu0 0.0
        %301 = vmatpush1.msra.mxu0 0.0
        %302 = vmatprep.subr.mxu0 0.0
        %303 = vmatpush1.msra.mxu0 0.0
        %304 = vmatprep.subr.mxu0 0.0
        %305 = vmatpush1.msra.mxu0 0.0
        %306 = vmatprep.subr.mxu0 0.0
        %307 = vmatpush1.msra.mxu0 0.0
        %308 = vmatprep.subr.mxu0 0.0
        %309 = vmatpush1.msra.mxu0 0.0
        %310 = vmatprep.subr.mxu0 0.0
        %311 = vmatpush1.msra.mxu0 0.0
        %312 = vmatprep.subr.mxu0 0.0
        %313 = vmatpush1.msra.mxu0 0.0
        %314 = vmatprep.subr.mxu0 0.0
        %315 = vmatpush1.msra.mxu0 0.0
        %316 = vmatprep.subr.mxu0 0.0
        %317 = vmatpush1.msra.mxu0 0.0
        %318 = vmatprep.subr.mxu0 0.0
        %319 = vmatpush1.msra.mxu0 0.0
        %320 = vmatprep.subr.mxu0 0.0
        %321 = vmatpush1.msra.mxu0 0.0
        %322 = vmatprep.subr.mxu0 0.0
        %323 = vmatpush1.msra.mxu0 0.0
        %324 = vmatprep.subr.mxu0 0.0
        %325 = vmatpush1.msra.mxu0 0.0
        %326 = vmatprep.subr.mxu0 0.0
        %327 = vmatpush1.msra.mxu0 0.0
        %328 = vmatprep.subr.mxu0 0.0
        %329 = vmatpush1.msra.mxu0 0.0
        %330 = vmatprep.subr.mxu0 0.0
        %331 = vmatpush1.msra.mxu0 0.0
        %332 = vmatprep.subr.mxu0 0.0
        %333 = vmatpush1.msra.mxu0 0.0
        %334 = vmatprep.mubr.f32.mxu0 0.0
        %335 = vmatmul.mubr.f32.gmra.mrb[0].mxu0 %v265
        %v336 = vpop.f32.mrb[0].mxu0
        %v337 = vadd.f32 %v261, %v336
        %v338 = vpop.f32.mrb[0].mxu0
        %339 = vmatprep.mubr.f32.mxu0 0.0
        %340 = vmatmul.mubr.f32.gmra.mrb[0].mxu0 %v268
        %v341 = vpop.f32.mrb[0].mxu0
        %v342 = vadd.f32 %v261, %v341
        %v343 = vpop.f32.mrb[0].mxu0
        %344 = vdwg.mxu0
        %v345 = vmax.f32 %v337, 0.0
        %v346 = vmax.f32 %v342, 0.0
        %v347 = vld [vmem:[%s3] sm:$0xff]
        %v348 = vld [vmem:[%s3 + $0x8] sm:$0xff]
        %v349 = vld [vmem:[%s3 + $0x10] sm:$0xff]
        %v350 = vld [vmem:[%s3 + $0x18] sm:$0xff]
        %v351 = vld [vmem:[%s3 + $0x20] sm:$0xff]
        %v352 = vld [vmem:[%s3 + $0x28] sm:$0xff]
        %v353 = vld [vmem:[%s3 + $0x30] sm:$0xff]
        %v354 = vld [vmem:[%s3 + $0x38] sm:$0xff]
        %v355 = vld [vmem:[%s4] sm:$0x1]
        %v357 = vlaneseq
        %v358 = vshrl.u32 %v357, 7
        %v359 = vsub.s32 0, %v358
        %v360 = vrot.slane %v355, %v359
        %vm362 = vcmask 523264
        %v364 = vsel %vm362, %v345, 0
        %v367 = vsel %vm362, %v346, 0
        %369 = vmatprep.subr.mxu0 0.0
        %370 = vmatpush1.msra.mxu0 %v347
        %371 = vmatprep.subr.mxu0 0.0
        %372 = vmatpush1.msra.mxu0 %v348
        %373 = vmatprep.subr.mxu0 0.0
        %374 = vmatpush1.msra.mxu0 %v349
        %375 = vmatprep.subr.mxu0 0.0
        %376 = vmatpush1.msra.mxu0 %v350
        %377 = vmatprep.subr.mxu0 0.0
        %378 = vmatpush1.msra.mxu0 %v351
        %379 = vmatprep.subr.mxu0 0.0
        %380 = vmatpush1.msra.mxu0 %v352
        %381 = vmatprep.subr.mxu0 0.0
        %382 = vmatpush1.msra.mxu0 %v353
        %383 = vmatprep.subr.mxu0 0.0
        %384 = vmatpush1.msra.mxu0 %v354
        %385 = vmatprep.subr.mxu0 0.0
        %386 = vmatpush1.msra.mxu0 0.0
        %387 = vmatprep.subr.mxu0 0.0
        %388 = vmatpush1.msra.mxu0 0.0
        %389 = vmatprep.subr.mxu0 0.0
        %390 = vmatpush1.msra.mxu0 0.0
        %391 = vmatprep.subr.mxu0 0.0
        %392 = vmatpush1.msra.mxu0 0.0
        %393 = vmatprep.subr.mxu0 0.0
        %394 = vmatpush1.msra.mxu0 0.0
        %395 = vmatprep.subr.mxu0 0.0
        %396 = vmatpush1.msra.mxu0 0.0
        %397 = vmatprep.subr.mxu0 0.0
        %398 = vmatpush1.msra.mxu0 0.0
        %399 = vmatprep.subr.mxu0 0.0
        %400 = vmatpush1.msra.mxu0 0.0
        %401 = vmatprep.subr.mxu0 0.0
        %402 = vmatpush1.msra.mxu0 0.0
        %403 = vmatprep.subr.mxu0 0.0
        %404 = vmatpush1.msra.mxu0 0.0
        %405 = vmatprep.subr.mxu0 0.0
        %406 = vmatpush1.msra.mxu0 0.0
        %407 = vmatprep.subr.mxu0 0.0
        %408 = vmatpush1.msra.mxu0 0.0
        %409 = vmatprep.subr.mxu0 0.0
        %410 = vmatpush1.msra.mxu0 0.0
        %411 = vmatprep.subr.mxu0 0.0
        %412 = vmatpush1.msra.mxu0 0.0
        %413 = vmatprep.subr.mxu0 0.0
        %414 = vmatpush1.msra.mxu0 0.0
        %415 = vmatprep.subr.mxu0 0.0
        %416 = vmatpush1.msra.mxu0 0.0
        %417 = vmatprep.subr.mxu0 0.0
        %418 = vmatpush1.msra.mxu0 0.0
        %419 = vmatprep.subr.mxu0 0.0
        %420 = vmatpush1.msra.mxu0 0.0
        %421 = vmatprep.subr.mxu0 0.0
        %422 = vmatpush1.msra.mxu0 0.0
        %423 = vmatprep.subr.mxu0 0.0
        %424 = vmatpush1.msra.mxu0 0.0
        %425 = vmatprep.subr.mxu0 0.0
        %426 = vmatpush1.msra.mxu0 0.0
        %427 = vmatprep.subr.mxu0 0.0
        %428 = vmatpush1.msra.mxu0 0.0
        %429 = vmatprep.subr.mxu0 0.0
        %430 = vmatpush1.msra.mxu0 0.0
        %431 = vmatprep.subr.mxu0 0.0
        %432 = vmatpush1.msra.mxu0 0.0
        %433 = vmatprep.mubr.f32.mxu0 0.0
        %434 = vmatmul.mubr.f32.gmra.mrb[0].mxu0 %v364
        %v435 = vpop.f32.mrb[0].mxu0
        %v436 = vadd.f32 %v360, %v435
        %v437 = vpop.f32.mrb[0].mxu0
        %438 = vmatprep.mubr.f32.mxu0 0.0
        %439 = vmatmul.mubr.f32.gmra.mrb[0].mxu0 %v367
        %v440 = vpop.f32.mrb[0].mxu0
        %v441 = vadd.f32 %v360, %v440
        %v442 = vpop.f32.mrb[0].mxu0
        %443 = vdwg.mxu0
        %444 = vst.msk [vmem:[%s230] sm:$0xff] %vm263, %v436
        %445 = vst.msk [vmem:[%s230 + $0x8] sm:$0xff] %vm263, %v441
        %s446 = sand.u32 %s137, 1
        %s447 = scalar_lea.sflag [#allocation3], %s446
        %s448 = sand.u32 %s137, 1
        %s449 = smul.addr %s448, 16
        %s450 = scalar_lea.vmem [#allocation2], %s449
        // Predicated region
        $region41: #{tpu_custom_call.1} parent=39 // pred_check
          %p451 = pneg %p147
        $region42: #{tpu_custom_call.1} parent=39 // pred_check_branch
          %453 = sbr.rel (%p451) target = $region44
        $region43: #{tpu_custom_call.1} parent=39 // pred_region
          %s454 = smul.u32 2, %s19
          %s455 = ssub.s32 3, %s454
          %p456 = scmp.lt.s32.totalorder %s455, 2
          %s457 = scalar_select %p456, %s455, 2
          %s458 = smul.u32 128, %s457
          %s460 = ssub.s32 256, %s458
          %461 = vsyncadd %s447, %s460
          %p462 = scmp.ne.s32.totalorder 0, %s458
          %s463 = smul.addr %s454, 128
          %s464 = scalar_lea.hbm %s5, %s463
          %s465 = smul.u32 8, %s457
          %s466 = sshll.u32 %s450, 4
          %s467 = int_to_ptr.vmem [resolvable:$true] %s466
          %s468 = sshll.u32 %s465, 4
          %472 = dma.vmem_to_hbm [thread:$0]  (%p462), %s467, %s468, %s464, %s447, 128, 128, 8
        $region44: #{tpu_custom_call.1} parent=39 // pred_fallthru
          _
      $region40: #{tpu_custom_call.1} parent=5 // pred_fallthru
        _
      %p473 = scmp.le.s32.totalorder 2, %s14
      // Predicated region
      $region45: #{tpu_custom_call.1} parent=5 // pred_check
        %p474 = pneg %p473
      $region46: #{tpu_custom_call.1} parent=5 // pred_check_branch
        %476 = sbr.rel (%p474) target = $region48
      $region47: #{tpu_custom_call.1} parent=5 // pred_region
        %s477 = ssub.s32 %s14, 2
        // Predicated region
        $region49: #{tpu_custom_call.1} parent=47 // pred_check
          %p478 = pneg %p153
        $region50: #{tpu_custom_call.1} parent=47 // pred_check_branch
          %480 = sbr.rel (%p478) target = $region52
        $region51: #{tpu_custom_call.1} parent=47 // pred_region
          %s481 = sand.u32 %s138, 1
          %s482 = scalar_lea.sflag [#allocation3], %s481
          %s483 = sand.u32 %s138, 1
          %s484 = smul.addr %s483, 16
          %s485 = scalar_lea.vmem [#allocation2], %s484
          %486 = dma.done %s482, 256
        $region52: #{tpu_custom_call.1} parent=47 // pred_fallthru
          _
      $region48: #{tpu_custom_call.1} parent=5 // pred_fallthru
        _
    $region6: #{tpu_custom_call.1} parent=1 // loop_footer
      %s18 = sadd.s32 1, %s14
    $region7: #{tpu_custom_call.1} parent=1 // loop_footer_branch
      %13 = sbr.rel target = $region3
    $region8: #{tpu_custom_call.1} parent=1 // loop_exit
      _
    %487 = vsyncpa [#allocation3], 1
    %s488 = scalar_lea.sflag [#allocation3], 1
    %489 = vsyncpa %s488, 1

</llo_original>
